<compile_context>
chip_gen: v7x
topology: tpu7x:2x2x1
jax: 0.10.0
libtpu: 0.0.40
codegen_flags: <defaults>
</compile_context>

<pallas_src>
import math
import numpy as np
import jax
import jax.numpy as jnp
from jax.experimental import pallas as pl
from jax.experimental.pallas import tpu as pltpu


# ------------------------------ tile selection ------------------------------ #
def _choose_tiles(B, C, HW, itemsize, target_bytes=2 * 1024 * 1024):
    """Pick (b_tile, hw_tile) so the x block is ~target_bytes and always an
    exact tiling (no padded lanes ever reach the sum/max)."""
    row_bytes = C * itemsize  # bytes of one (C, 1) lane column per element

    # Spatial tile: full HW if a single element fits the budget; otherwise the
    # largest multiple of 128 that divides HW and fits; otherwise the smallest
    # such multiple; otherwise fall back to the (always legal) full extent.
    candidates = [t for t in range(128, HW, 128) if HW % t == 0]
    fitting = [t for t in candidates if t * row_bytes <= target_bytes]
    if HW * row_bytes <= target_bytes or not candidates:
        hw_tile = HW
    elif fitting:
        hw_tile = max(fitting)
    else:
        hw_tile = min(candidates)

    # Batch tile: largest divisor of B that keeps the block under budget while
    # leaving >= 2 steps on the (megacore-parallel) batch grid axis.
    b_tile = 1
    for d in range(B, 0, -1):
        if B % d != 0:
            continue
        if d * hw_tile * row_bytes > target_bytes:
            continue
        if d == 1 or B == 1 or (B // d) >= 2:
            b_tile = d
            break
    return b_tile, hw_tile


# ------------------------------ Pallas kernel ------------------------------ #
def _make_kernel(inv_hw, b_tile):
    def kernel(x_ref, w1t_ref, w2t_ref, o_ref, sum_acc, max_acc):
        # x_ref : [B_TILE, C, HW_TILE]   (spatial on lanes, channels on sublanes)
        # w1t   : [C, C_red]   (conv1 weight, pre-transposed host-side)
        # w2t   : [C_red, C]   (conv2 weight, pre-transposed host-side)
        # o_ref : [1, B_TILE, C]         (lane-dense output tile)
        # sum_acc / max_acc : [B_TILE, C] VMEM running accumulators
        k = pl.program_id(1)

        @pl.when(k == 0)
        def _():
            sum_acc[...] = jnp.zeros_like(sum_acc)
            max_acc[...] = jnp.full_like(max_acc, -jnp.inf)

        # Stream one spatial tile; accumulate in f32 (handles bf16 input too).
        x = x_ref[...].astype(jnp.float32)                    # [B_TILE, C, HW_TILE]
        sum_acc[...] += jnp.sum(x, axis=-1)                   # [B_TILE, C]
        max_acc[...] = jnp.maximum(max_acc[...], jnp.max(x, axis=-1))

        @pl.when(k == pl.num_programs(1) - 1)
        def _():
            avg = sum_acc[...] * inv_hw                       # [B_TILE, C]
            mx = max_acc[...]                                 # [B_TILE, C]
            pooled = jnp.concatenate([avg, mx], axis=0)       # [2*B_TILE, C]
            # Shared two-layer MLP, one wide matmul per layer for all rows.
            h = jnp.dot(pooled, w1t_ref[...],
                        preferred_element_type=jnp.float32)   # [2*B_TILE, C_red]
            h = jnp.where(h > 0, h, 0.01 * h)                 # LeakyReLU(0.01)
            y = jnp.dot(h, w2t_ref[...],
                        preferred_element_type=jnp.float32)   # [2*B_TILE, C]
            logits = y[:b_tile] + y[b_tile:]                  # avg-path + max-path
            o_ref[0] = jax.nn.sigmoid(logits)                 # [B_TILE, C]

    return kernel


# ------------------------------ forward (JAX) ------------------------------ #
def channel_attention_forward(x, w1, w2, *, stream_bf16=False):
    """x: [B, C, H, W] NCHW; w1: [C//r, C]; w2: [C, C//r]. Returns [B, C, 1, 1]."""
    B, C, H, W = x.shape
    C_red = w1.shape[0]
    hw = H * W

    # Optional: halve the HBM read stream (accuracy tradeoff, off by default).
    x = x.astype(jnp.bfloat16) if stream_bf16 else x

    # NCHW -> [B, C, H*W]: spatial collapsed onto the lane axis (free reshape).
    x_flat = x.reshape(B, C, hw)

    # Pre-transpose the tiny 1x1-conv weights host-side so the batched
    # [rows, C] pooled operand contracts its lane-contiguous C axis directly.
    w1t = jnp.transpose(w1)   # [C, C_red]
    w2t = jnp.transpose(w2)   # [C_red, C]

    b_tile, hw_tile = _choose_tiles(B, C, hw, x_flat.dtype.itemsize)
    n_bt = B // b_tile
    n_k = hw // hw_tile

    out = pl.pallas_call(
        _make_kernel(1.0 / hw, b_tile),
        out_shape=jax.ShapeDtypeStruct((n_bt, b_tile, C), jnp.float32),
        grid=(n_bt, n_k),
        in_specs=[
            pl.BlockSpec((b_tile, C, hw_tile), lambda b, k: (b, 0, k)),
            pl.BlockSpec((C, C_red), lambda b, k: (0, 0)),
            pl.BlockSpec((C_red, C), lambda b, k: (0, 0)),
        ],
        out_specs=pl.BlockSpec((1, b_tile, C), lambda b, k: (b, 0, 0)),
        scratch_shapes=[
            pltpu.VMEM((b_tile, C), jnp.float32),   # running sum
            pltpu.VMEM((b_tile, C), jnp.float32),   # running max
        ],
        compiler_params=pltpu.CompilerParams(
            dimension_semantics=("parallel", "arbitrary"),
            # Explicit limit so the ~2 MiB/block budget also holds on v5e's
            # 16 MiB scoped default; comfortably under v7x's 64 MiB physical.
            vmem_limit_bytes=32 * 1024 * 1024,
        ),
    )(x_flat, w1t, w2t)

    return out.reshape(B, C, 1, 1)


# --------------------- pure-JAX reference (torch-mirroring) ---------------- #
def reference_forward(x, w1, w2):
    B, C, H, W = x.shape
    avg = jnp.mean(x, axis=(2, 3))                            # [B, C]
    mx = jnp.max(x, axis=(2, 3))                              # [B, C]

    def fc(p):                                                # p: [B, C]
        h = p @ w1.T                                          # conv1 (1x1, no bias)
        h = jnp.where(h > 0, h, 0.01 * h)                     # LeakyReLU(0.01)
        return h @ w2.T                                       # conv2 (1x1, no bias)

    out = jax.nn.sigmoid(fc(avg) + fc(mx))                    # [B, C]
    return out.reshape(B, C, 1, 1)


# ---------------------------------- main ----------------------------------- #
if __name__ == "__main__":
    key = jax.random.PRNGKey(0)
    k1, k2, k3 = jax.random.split(key, 3)

    # reduction_ratio=16 needs C >= 16; use the smallest "real" VAE-ish config.
    B, C, H, W = 4, 64, 16, 16
    REDUCTION = 16
    C_RED = C // REDUCTION

    x = jax.random.normal(k1, (B, C, H, W), jnp.float32)
    # PyTorch conv weight layouts, squeezed over the 1x1 kernel dims.
    w1 = jax.random.normal(k2, (C_RED, C), jnp.float32) / math.sqrt(C)
    w2 = jax.random.normal(k3, (C, C_RED), jnp.float32) / math.sqrt(C_RED)

    out = channel_attention_forward(x, w1, w2)
    out = jax.block_until_ready(out)
    assert out.shape == (B, C, 1, 1)

    ref = jax.block_until_ready(reference_forward(x, w1, w2))
    np.testing.assert_allclose(np.asarray(out), np.asarray(ref),
                               rtol=1e-4, atol=1e-5)

    print("KERNEL_OK")
</pallas_src>

<mosaic_0001>
module attributes {stable_mosaic.version = 11 : i64} {
  func.func @kernel(%arg0: i32, %arg1: i32, %arg2: memref<2x64x256xf32, #tpu.memory_space<vmem>>, %arg3: memref<64x4xf32, #tpu.memory_space<vmem>>, %arg4: memref<4x64xf32, #tpu.memory_space<vmem>>, %arg5: memref<1x2x64xf32, #tpu.memory_space<vmem>>, %arg6: memref<2x64xf32, #tpu.memory_space<vmem>>, %arg7: memref<2x64xf32, #tpu.memory_space<vmem>>) attributes {dimension_semantics = [#tpu.dimension_semantics<parallel>, #tpu.dimension_semantics<arbitrary>], iteration_bounds = array<i64: 2, 1>, scalar_prefetch = 0 : i64, scratch_operands = 2 : i64, tpu.core_type = #tpu.core_type<tc>, window_params = [{transform_indices = @transform_0, window_bounds = array<i64: 2, 64, 256>}, {pipeline_mode = #tpu.pipeline_mode<synchronous>, transform_indices = @transform_1, window_bounds = array<i64: 64, 4>}, {pipeline_mode = #tpu.pipeline_mode<synchronous>, transform_indices = @transform_2, window_bounds = array<i64: 4, 64>}, {transform_indices = @transform_3, window_bounds = array<i64: 1, 2, 64>}]} {
    %c0_i32 = arith.constant 0 : i32
    %0 = arith.cmpi eq, %arg1, %c0_i32 : i32
    %1 = arith.extui %0 : i1 to i32
    %c0_i32_0 = arith.constant 0 : i32
    %2 = arith.cmpi ne, %1, %c0_i32_0 : i32
    scf.if %2 {
      %cst_14 = arith.constant 0.000000e+00 : f32
      %15 = vector.broadcast %cst_14 : f32 to vector<2x64xf32>
      %c0_15 = arith.constant 0 : index
      %c0_16 = arith.constant 0 : index
      %16 = vector.load %arg6[%c0_15, %c0_16] : memref<2x64xf32, #tpu.memory_space<vmem>>, vector<2x64xf32>
      tpu.vector_store %arg6[%c0_15, %c0_16], %15 {strides = array<i32>} : memref<2x64xf32, #tpu.memory_space<vmem>>, vector<2x64xf32>,
      %cst_17 = arith.constant 0xFF800000 : f32
      %17 = vector.broadcast %cst_17 : f32 to vector<2x64xf32>
      %c0_18 = arith.constant 0 : index
      %c0_19 = arith.constant 0 : index
      %18 = vector.load %arg7[%c0_18, %c0_19] : memref<2x64xf32, #tpu.memory_space<vmem>>, vector<2x64xf32>
      tpu.vector_store %arg7[%c0_18, %c0_19], %17 {strides = array<i32>} : memref<2x64xf32, #tpu.memory_space<vmem>>, vector<2x64xf32>,
    } else {
    }
    %c0 = arith.constant 0 : index
    %c0_1 = arith.constant 0 : index
    %c0_2 = arith.constant 0 : index
    %3 = vector.load %arg2[%c0, %c0_1, %c0_2] : memref<2x64x256xf32, #tpu.memory_space<vmem>>, vector<2x64x256xf32>
    %c0_3 = arith.constant 0 : index
    %c0_4 = arith.constant 0 : index
    %4 = vector.load %arg6[%c0_3, %c0_4] : memref<2x64xf32, #tpu.memory_space<vmem>>, vector<2x64xf32>
    %cst = arith.constant dense<0.000000e+00> : vector<2x64xf32>
    %5 = vector.multi_reduction <add>, %3, %cst [2] : vector<2x64x256xf32> to vector<2x64xf32>
    %6 = arith.addf %4, %5 : vector<2x64xf32>
    %c0_5 = arith.constant 0 : index
    %c0_6 = arith.constant 0 : index
    %7 = vector.load %arg6[%c0_5, %c0_6] : memref<2x64xf32, #tpu.memory_space<vmem>>, vector<2x64xf32>
    tpu.vector_store %arg6[%c0_5, %c0_6], %6 {strides = array<i32>} : memref<2x64xf32, #tpu.memory_space<vmem>>, vector<2x64xf32>,
    %c0_7 = arith.constant 0 : index
    %c0_8 = arith.constant 0 : index
    %8 = vector.load %arg7[%c0_7, %c0_8] : memref<2x64xf32, #tpu.memory_space<vmem>>, vector<2x64xf32>
    %cst_9 = arith.constant dense<0xFF800000> : vector<2x64xf32>
    %9 = vector.multi_reduction <maximumf>, %3, %cst_9 [2] : vector<2x64x256xf32> to vector<2x64xf32>
    %10 = arith.maximumf %8, %9 : vector<2x64xf32>
    %c0_10 = arith.constant 0 : index
    %c0_11 = arith.constant 0 : index
    %11 = vector.load %arg7[%c0_10, %c0_11] : memref<2x64xf32, #tpu.memory_space<vmem>>, vector<2x64xf32>
    tpu.vector_store %arg7[%c0_10, %c0_11], %10 {strides = array<i32>} : memref<2x64xf32, #tpu.memory_space<vmem>>, vector<2x64xf32>,
    %c0_i32_12 = arith.constant 0 : i32
    %12 = arith.cmpi eq, %arg1, %c0_i32_12 : i32
    %13 = arith.extui %12 : i1 to i32
    %c0_i32_13 = arith.constant 0 : i32
    %14 = arith.cmpi ne, %13, %c0_i32_13 : i32
    scf.if %14 {
      %c0_14 = arith.constant 0 : index
      %c0_15 = arith.constant 0 : index
      %15 = vector.load %arg6[%c0_14, %c0_15] : memref<2x64xf32, #tpu.memory_space<vmem>>, vector<2x64xf32>
      %cst_16 = arith.constant 3.906250e-03 : f32
      %16 = vector.broadcast %cst_16 : f32 to vector<2x64xf32>
      %17 = arith.mulf %15, %16 : vector<2x64xf32>
      %c0_17 = arith.constant 0 : index
      %c0_18 = arith.constant 0 : index
      %18 = vector.load %arg7[%c0_17, %c0_18] : memref<2x64xf32, #tpu.memory_space<vmem>>, vector<2x64xf32>
      %19 = tpu.concatenate %17, %18 in 0 : vector<2x64xf32>, vector<2x64xf32> -> vector<4x64xf32>
      %c0_19 = arith.constant 0 : index
      %c0_20 = arith.constant 0 : index
      %20 = vector.load %arg3[%c0_19, %c0_20] : memref<64x4xf32, #tpu.memory_space<vmem>>, vector<64x4xf32>
      %cst_21 = arith.constant dense<0.000000e+00> : vector<4x4xf32>
      %21 = tpu.matmul %19, %20, %cst_21 {dimension_numbers = #tpu.dot_dimension_numbers<[1], [0], [0], [1], [0, 0, 1, 1], [], []>} : vector<4x64xf32>, vector<64x4xf32>, vector<4x4xf32> -> vector<4x4xf32>
      %cst_22 = arith.constant 0.000000e+00 : f32
      %22 = vector.broadcast %cst_22 : f32 to vector<4x4xf32>
      %23 = arith.cmpf ogt, %21, %22 : vector<4x4xf32>
      %cst_23 = arith.constant 0.00999999977 : f32
      %24 = vector.broadcast %cst_23 : f32 to vector<4x4xf32>
      %25 = arith.mulf %24, %21 : vector<4x4xf32>
      %26 = arith.select %23, %21, %25 : vector<4x4xi1>, vector<4x4xf32>
      %c0_24 = arith.constant 0 : index
      %c0_25 = arith.constant 0 : index
      %27 = vector.load %arg4[%c0_24, %c0_25] : memref<4x64xf32, #tpu.memory_space<vmem>>, vector<4x64xf32>
      %cst_26 = arith.constant dense<0.000000e+00> : vector<4x64xf32>
      %28 = tpu.matmul %26, %27, %cst_26 {dimension_numbers = #tpu.dot_dimension_numbers<[1], [0], [0], [1], [0, 0, 1, 1], [], []>} : vector<4x4xf32>, vector<4x64xf32>, vector<4x64xf32> -> vector<4x64xf32>
      %29 = vector.extract_strided_slice %28 {offsets = [0, 0], sizes = [2, 64], strides = [1, 1]} : vector<4x64xf32> to vector<2x64xf32>
      %30 = vector.extract_strided_slice %28 {offsets = [2, 0], sizes = [2, 64], strides = [1, 1]} : vector<4x64xf32> to vector<2x64xf32>
      %31 = arith.addf %29, %30 : vector<2x64xf32>
      %32 = arith.negf %31 : vector<2x64xf32>
      %33 = math.exp %32 : vector<2x64xf32>
      %cst_27 = arith.constant 1.000000e+00 : f32
      %34 = vector.broadcast %cst_27 : f32 to vector<2x64xf32>
      %35 = arith.addf %34, %33 : vector<2x64xf32>
      %36 = arith.divf %34, %35 : vector<2x64xf32>
      %c0_28 = arith.constant 0 : index
      %c0_29 = arith.constant 0 : index
      %c0_30 = arith.constant 0 : index
      %37 = vector.load %arg5[%c0_28, %c0_29, %c0_30] : memref<1x2x64xf32, #tpu.memory_space<vmem>>, vector<1x2x64xf32>
      %38 = vector.shape_cast %37 : vector<1x2x64xf32> to vector<2x64xf32>
      %39 = vector.shape_cast %36 : vector<2x64xf32> to vector<1x2x64xf32>
      tpu.vector_store %arg5[%c0_28, %c0_29, %c0_30], %39 {strides = array<i32>} : memref<1x2x64xf32, #tpu.memory_space<vmem>>, vector<1x2x64xf32>,
    } else {
    }
    return
  }
  func.func @transform_0(%arg0: i32, %arg1: i32) -> (i32, i32, i32) {
    %c0_i32 = arith.constant 0 : i32
    %c0_i32_0 = arith.constant 0 : i32
    return %arg0, %c0_i32, %arg1 : i32, i32, i32
  }
  func.func @transform_1(%arg0: i32, %arg1: i32) -> (i32, i32) {
    %c0_i32 = arith.constant 0 : i32
    %c0_i32_0 = arith.constant 0 : i32
    %c0_i32_1 = arith.constant 0 : i32
    return %c0_i32, %c0_i32_0 : i32, i32
  }
  func.func @transform_2(%arg0: i32, %arg1: i32) -> (i32, i32) {
    %c0_i32 = arith.constant 0 : i32
    %c0_i32_0 = arith.constant 0 : i32
    %c0_i32_1 = arith.constant 0 : i32
    return %c0_i32, %c0_i32_0 : i32, i32
  }
  func.func @transform_3(%arg0: i32, %arg1: i32) -> (i32, i32, i32) {
    %c0_i32 = arith.constant 0 : i32
    %c0_i32_0 = arith.constant 0 : i32
    %c0_i32_1 = arith.constant 0 : i32
    return %arg0, %c0_i32, %c0_i32_0 : i32, i32, i32
  }
}

</mosaic_0001>

<llo_original>
// kernel: tpu_custom_call.1
$region0: #{tpu_custom_call.1}
  #allocation0 [shape = 'u32[]', space=smem, size = 0x4, offset = 0x4, fixed_abs, tag = 'smem constant byte address 0x4 - core index']
  #allocation1 [shape = 'u32[144,128]{1,0:T(1,128)}', space=vmem, size = 0x12000, scoped, tag = 'internal scratch']
  #allocation2 [shape = 'f32[2,64]{1,0:T(2,128)}', space=vmem, size = 0x400, scoped, tag = 'scratch operand']
  #allocation3 [shape = 'f32[2,64]{1,0:T(2,128)}', space=vmem, size = 0x400, scoped, tag = 'scratch operand']
  %s0 = inlined_call_operand.hbm [shape: f32[4,64,256], index: 0, kind: input, shape index: {}]
  %s1 = inlined_call_operand.vmem [shape: f32[64,4], index: 1, kind: input, shape index: {}]
  %s2 = inlined_call_operand.vmem [shape: f32[4,64], index: 2, kind: input, shape index: {}]
  %s3 = inlined_call_operand.hbm [shape: f32[2,2,64], index: 3, kind: output, shape index: {}]
  %s4 = sld [smem:[#allocation0]]
  $region57: #{tpu_custom_call.1} parent=0
    _
  %s6 = ssub.s32 1, %s4
  %s7 = scalar_select 0, %s6, %s4
  $region1: #{tpu_custom_call.1} parent=0
    #allocation4 [shape = 'u8[262144]{0}', space=vmem, size = 0x40000, scoped, tag = 'input window, operand 0']
    #allocation5 [shape = 's32[2]{0}', space=sflag, size = 0x8, scoped, tag = 'scoped memory for tpu_custom_call.1']
    #allocation6 [shape = 's32[2]{0}', space=sflag, size = 0x8, scoped, tag = 'scoped memory for tpu_custom_call.1']
    #allocation7 [shape = 'u8[2048]{0}', space=vmem, size = 0x800, scoped, tag = 'output window, operand 0']
    %8 = vsyncpa [#allocation5], 0
    %s9 = scalar_lea.sflag [#allocation5], 1
    %10 = vsyncpa %s9, 0
    %11 = vsyncpa [#allocation6], 0
    %s12 = scalar_lea.sflag [#allocation6], 1
    %13 = vsyncpa %s12, 0
    loop: start=0, step=1, limit=4
    $region2: #{tpu_custom_call.1} parent=1 // loop_pre_header
      _
    $region3: #{tpu_custom_call.1} parent=1 // loop_header
      %s15 = sphi 0, %s19
      %p16 = scmp.ge.s32.totalorder %s15, 4
      %s22 = sphi 0, %s34
      %s23 = sphi 0, %s30
      %s24 = sphi 0, %s22
      %s25 = sphi 0, %s23
      %s26 = sphi 0, %s24
      %s27 = sphi 0, %s25
      %s39 = sphi 0, %s41
      %s42 = sphi 0, %s39
      %s43 = sphi 0, %s42
      %s59 = sphi 0, %s43
      %s63 = sphi 0, %s63
      %s65 = sphi 0, %s63
      %s66 = sphi 0, %s65
      %s80 = sphi 0, %s66
      %s84 = sphi 0, %s84
      %s86 = sphi 0, %s84
      %s87 = sphi 0, %s86
      %s101 = sphi 0, %s87
      %s107 = sphi 0, %s109
      %s110 = sphi 0, %s107
      %s111 = sphi 0, %s110
      %s127 = sphi 0, %s111
    $region4: #{tpu_custom_call.1} parent=1 // loop_header_branch
      %18 = sbr.rel (%p16) target = $region8
    $region5: #{tpu_custom_call.1} parent=1 // loop_body
      %s20 = ssub.s32 %s15, 1
      %s21 = ssub.s32 %s15, 2
      %s28 = sadd.s32 1, %s23
      %p29 = scmp.ge.s32.totalorder %s28, 1
      %s30 = scalar_select %p29, 0, %s28
      %s31 = sadd.s32 1, %s22
      %s32 = scalar_select %p29, %s31, %s22
      %p33 = scmp.ge.s32.totalorder %s32, 2
      %s34 = scalar_select %p33, 0, %s32
      %s35 = ssub.s32 %s22, %s34
      %s36 = ssub.s32 %s23, %s30
      %s37 = sor.u32 %s35, %s36
      %p38 = scmp.eq.s32.totalorder %s37, 0
      %s40 = sadd.s32 %s39, 1
      %s41 = scalar_select %p38, %s39, %s40
      %p44 = pneg %p38
      %p45 = scmp.eq.s32.totalorder %s15, 1
      %p46 = por %p44, %p45
      %p47 = scmp.ne.s32.totalorder %s39, %s42
      %p48 = scmp.eq.s32.totalorder %s15, 0
      %p49 = por %p47, %p48
      %p50 = scmp.ne.s32.totalorder %s39, %s42
      %p51 = scmp.eq.s32.totalorder %s20, 1
      %p52 = por %p50, %p51
      %p53 = scmp.ne.s32.totalorder %s42, %s43
      %p54 = scmp.eq.s32.totalorder %s20, 0
      %p55 = por %p53, %p54
      %p56 = scmp.ne.s32.totalorder %s42, %s43
      %p57 = scmp.eq.s32.totalorder %s21, 1
      %p58 = por %p56, %p57
      %p60 = scmp.ne.s32.totalorder %s43, %s59
      %p61 = scmp.eq.s32.totalorder %s21, 0
      %p62 = por %p60, %p61
      %s64 = sadd.s32 %s63, 1
      %p67 = scmp.eq.s32.totalorder %s15, 1
      %p68 = scmp.ne.s32.totalorder %s63, %s65
      %p69 = scmp.eq.s32.totalorder %s15, 0
      %p70 = por %p68, %p69
      %p71 = scmp.ne.s32.totalorder %s63, %s65
      %p72 = scmp.eq.s32.totalorder %s20, 1
      %p73 = por %p71, %p72
      %p74 = scmp.ne.s32.totalorder %s65, %s66
      %p75 = scmp.eq.s32.totalorder %s20, 0
      %p76 = por %p74, %p75
      %p77 = scmp.ne.s32.totalorder %s65, %s66
      %p78 = scmp.eq.s32.totalorder %s21, 1
      %p79 = por %p77, %p78
      %p81 = scmp.ne.s32.totalorder %s66, %s80
      %p82 = scmp.eq.s32.totalorder %s21, 0
      %p83 = por %p81, %p82
      %s85 = sadd.s32 %s84, 1
      %p88 = scmp.eq.s32.totalorder %s15, 1
      %p89 = scmp.ne.s32.totalorder %s84, %s86
      %p90 = scmp.eq.s32.totalorder %s15, 0
      %p91 = por %p89, %p90
      %p92 = scmp.ne.s32.totalorder %s84, %s86
      %p93 = scmp.eq.s32.totalorder %s20, 1
      %p94 = por %p92, %p93
      %p95 = scmp.ne.s32.totalorder %s86, %s87
      %p96 = scmp.eq.s32.totalorder %s20, 0
      %p97 = por %p95, %p96
      %p98 = scmp.ne.s32.totalorder %s86, %s87
      %p99 = scmp.eq.s32.totalorder %s21, 1
      %p100 = por %p98, %p99
      %p102 = scmp.ne.s32.totalorder %s87, %s101
      %p103 = scmp.eq.s32.totalorder %s21, 0
      %p104 = por %p102, %p103
      %s105 = ssub.s32 %s22, %s34
      %p106 = scmp.eq.s32.totalorder %s105, 0
      %s108 = sadd.s32 %s107, 1
      %s109 = scalar_select %p106, %s107, %s108
      %p112 = pneg %p106
      %p113 = scmp.eq.s32.totalorder %s15, 1
      %p114 = por %p112, %p113
      %p115 = scmp.ne.s32.totalorder %s107, %s110
      %p116 = scmp.eq.s32.totalorder %s15, 0
      %p117 = por %p115, %p116
      %p118 = scmp.ne.s32.totalorder %s107, %s110
      %p119 = scmp.eq.s32.totalorder %s20, 1
      %p120 = por %p118, %p119
      %p121 = scmp.ne.s32.totalorder %s110, %s111
      %p122 = scmp.eq.s32.totalorder %s20, 0
      %p123 = por %p121, %p122
      %p124 = scmp.ne.s32.totalorder %s110, %s111
      %p125 = scmp.eq.s32.totalorder %s21, 1
      %p126 = por %p124, %p125
      %p128 = scmp.ne.s32.totalorder %s111, %s127
      %p129 = scmp.eq.s32.totalorder %s21, 0
      %p130 = por %p128, %p129
      %p131 = scmp.le.s32.totalorder 1, %s15
      %p132 = scmp.lt.s32.totalorder %s15, 3
      %p133 = pnand %p131, %p132
      %p134 = pneg %p133
      // Predicated region
      $region9: #{tpu_custom_call.1} parent=5 // pred_check
        _
      $region10: #{tpu_custom_call.1} parent=5 // pred_check_branch
        %136 = sbr.rel (%p133) target = $region12
      $region11: #{tpu_custom_call.1} parent=5 // pred_region
        %s137 = ssub.s32 %s15, 1
        // Predicated region
        $region13: #{tpu_custom_call.1} parent=11 // pred_check
          %p138 = pneg %p76
        $region14: #{tpu_custom_call.1} parent=11 // pred_check_branch
          %140 = sbr.rel (%p138) target = $region16
        $region15: #{tpu_custom_call.1} parent=11 // pred_region
          _
        $region16: #{tpu_custom_call.1} parent=11 // pred_fallthru
          _
        // Predicated region
        $region17: #{tpu_custom_call.1} parent=11 // pred_check
          %p141 = pneg %p97
        $region18: #{tpu_custom_call.1} parent=11 // pred_check_branch
          %143 = sbr.rel (%p141) target = $region20
        $region19: #{tpu_custom_call.1} parent=11 // pred_region
          _
        $region20: #{tpu_custom_call.1} parent=11 // pred_fallthru
          _
      $region12: #{tpu_custom_call.1} parent=5 // pred_fallthru
        _
      %p144 = scmp.lt.s32.totalorder %s15, 2
      // Predicated region
      $region21: #{tpu_custom_call.1} parent=5 // pred_check
        %p145 = pneg %p144
      $region22: #{tpu_custom_call.1} parent=5 // pred_check_branch
        %147 = sbr.rel (%p145) target = $region24
      $region23: #{tpu_custom_call.1} parent=5 // pred_region
        // Predicated region
        $region25: #{tpu_custom_call.1} parent=23 // pred_check
          %p148 = pneg %p49
        $region26: #{tpu_custom_call.1} parent=23 // pred_check_branch
          %150 = sbr.rel (%p148) target = $region28
        $region27: #{tpu_custom_call.1} parent=23 // pred_region
          %s151 = sand.u32 %s39, 1
          %s152 = scalar_lea.sflag [#allocation5], %s151
          %s153 = sand.u32 %s39, 1
          %s154 = smul.addr %s153, 256
          %s155 = scalar_lea.vmem [#allocation4], %s154
          %s156 = smul.u32 2, %s22
          %s157 = smul.u32 2, %s23
          %s159 = ssub.s32 4096, 4096
          %160 = vsyncadd %s152, %s159
          %s161 = smul.addr %s156, 16
          %s162 = sadd.s32 %s157, %s161
          %s163 = smul.addr %s162, 128
          %s164 = scalar_lea.hbm %s0, %s163
          %s165 = sshll.u32 %s155, 4
          %s166 = int_to_ptr.vmem [resolvable:$true] %s165
          %171 = dma.hbm_to_vmem [thread:$0]  %s164, 4096, %s166, %s152, 256, 256, 16
        $region28: #{tpu_custom_call.1} parent=23 // pred_fallthru
          _
      $region24: #{tpu_custom_call.1} parent=5 // pred_fallthru
        _
      %p172 = scmp.le.s32.totalorder 1, %s15
      %p173 = scmp.lt.s32.totalorder %s15, 3
      %p174 = pnand %p172, %p173
      %p175 = pneg %p174
      // Predicated region
      $region29: #{tpu_custom_call.1} parent=5 // pred_check
        _
      $region30: #{tpu_custom_call.1} parent=5 // pred_check_branch
        %177 = sbr.rel (%p174) target = $region32
      $region31: #{tpu_custom_call.1} parent=5 // pred_region
        %s178 = ssub.s32 %s15, 1
        %s179 = sand.u32 %s42, 1
        %s180 = scalar_lea.sflag [#allocation5], %s179
        %s181 = sand.u32 %s42, 1
        %s182 = smul.addr %s181, 256
        %s183 = scalar_lea.vmem [#allocation4], %s182
        // Predicated region
        $region33: #{tpu_custom_call.1} parent=31 // pred_check
          %p184 = pneg %p55
        $region34: #{tpu_custom_call.1} parent=31 // pred_check_branch
          %186 = sbr.rel (%p184) target = $region36
        $region35: #{tpu_custom_call.1} parent=31 // pred_region
          %187 = dma.done %s180, 4096
        $region36: #{tpu_custom_call.1} parent=31 // pred_fallthru
          _
        %s188 = sand.u32 %s42, 1
        %s189 = scalar_lea.sflag [#allocation5], %s188
        %s190 = sand.u32 %s42, 1
        %s191 = smul.addr %s190, 256
        %s192 = scalar_lea.vmem [#allocation4], %s191
        %p193 = pneg %p55
        %p194 = pneg %p52
        %p195 = pneg %p76
        %p196 = pneg %p73
        %p197 = pneg %p97
        %p198 = pneg %p94
        %p199 = pneg %p123
        %p200 = pneg %p120
        %s201 = sand.u32 %s110, 1
        %s202 = scalar_lea.sflag [#allocation6], %s201
        %s203 = sand.u32 %s110, 1
        %s204 = smul.addr %s203, 2
        %s205 = scalar_lea.vmem [#allocation7], %s204
        %s206 = smul.u32 2, %s24
        %s207 = smul.u32 2, %s25
        %p208 = scmp.eq.s32.totalorder %s25, 0
        // Predicated region
        $region37: #{tpu_custom_call.1} parent=31 // pred_check
          %p209 = pneg %p208
        $region38: #{tpu_custom_call.1} parent=31 // pred_check_branch
          %211 = sbr.rel (%p209) target = $region40
        $region39: #{tpu_custom_call.1} parent=31 // pred_region
          %vm212 = vcmask 517120
          %213 = vst.msk [vmem:[#allocation2] sm:$0x3] %vm212, 0.0
          %214 = vst.msk [vmem:[#allocation3] sm:$0x3] %vm212, -inf
        $region40: #{tpu_custom_call.1} parent=31 // pred_fallthru
          _
        %v215 = vld [vmem:[%s183] sm:$0xff]
        %v216 = vld [vmem:[%s183 + $0x8] sm:$0xff]
        %v217 = vld [vmem:[%s183 + $0x10] sm:$0xff]
        %v218 = vld [vmem:[%s183 + $0x18] sm:$0xff]
        %v219 = vld [vmem:[%s183 + $0x20] sm:$0xff]
        %v220 = vld [vmem:[%s183 + $0x28] sm:$0xff]
        %v221 = vld [vmem:[%s183 + $0x30] sm:$0xff]
        %v222 = vld [vmem:[%s183 + $0x38] sm:$0xff]
        %v223 = vld [vmem:[%s183 + $0x40] sm:$0xff]
        %v224 = vld [vmem:[%s183 + $0x48] sm:$0xff]
        %v225 = vld [vmem:[%s183 + $0x50] sm:$0xff]
        %v226 = vld [vmem:[%s183 + $0x58] sm:$0xff]
        %v227 = vld [vmem:[%s183 + $0x60] sm:$0xff]
        %v228 = vld [vmem:[%s183 + $0x68] sm:$0xff]
        %v229 = vld [vmem:[%s183 + $0x70] sm:$0xff]
        %v230 = vld [vmem:[%s183 + $0x78] sm:$0xff]
        %v231 = vld [vmem:[%s183 + $0x80] sm:$0xff]
        %v232 = vld [vmem:[%s183 + $0x88] sm:$0xff]
        %v233 = vld [vmem:[%s183 + $0x90] sm:$0xff]
        %v234 = vld [vmem:[%s183 + $0x98] sm:$0xff]
        %v235 = vld [vmem:[%s183 + $0xa0] sm:$0xff]
        %v236 = vld [vmem:[%s183 + $0xa8] sm:$0xff]
        %v237 = vld [vmem:[%s183 + $0xb0] sm:$0xff]
        %v238 = vld [vmem:[%s183 + $0xb8] sm:$0xff]
        %v239 = vld [vmem:[%s183 + $0xc0] sm:$0xff]
        %v240 = vld [vmem:[%s183 + $0xc8] sm:$0xff]
        %v241 = vld [vmem:[%s183 + $0xd0] sm:$0xff]
        %v242 = vld [vmem:[%s183 + $0xd8] sm:$0xff]
        %v243 = vld [vmem:[%s183 + $0xe0] sm:$0xff]
        %v244 = vld [vmem:[%s183 + $0xe8] sm:$0xff]
        %v245 = vld [vmem:[%s183 + $0xf0] sm:$0xff]
        %v246 = vld [vmem:[%s183 + $0xf8] sm:$0xff]
        %v247 = vld [vmem:[#allocation2] sm:$0x3]
        %v248 = vadd.f32 %v215, %v216
        %249 = vadd.xlane.f32.xlu0 %v248
        %v250 = vpop.xlane.xlu0 %249
        %v251 = vadd.f32 %v217, %v218
        %252 = vadd.xlane.f32.xlu0 %v251
        %v253 = vpop.xlane.xlu0 %252
        %v254 = vadd.f32 %v219, %v220
        %255 = vadd.xlane.f32.xlu0 %v254
        %v256 = vpop.xlane.xlu0 %255
        %v257 = vadd.f32 %v221, %v222
        %258 = vadd.xlane.f32.xlu0 %v257
        %v259 = vpop.xlane.xlu0 %258
        %v260 = vadd.f32 %v223, %v224
        %261 = vadd.xlane.f32.xlu0 %v260
        %v262 = vpop.xlane.xlu0 %261
        %v263 = vadd.f32 %v225, %v226
        %264 = vadd.xlane.f32.xlu0 %v263
        %v265 = vpop.xlane.xlu0 %264
        %v266 = vadd.f32 %v227, %v228
        %267 = vadd.xlane.f32.xlu0 %v266
        %v268 = vpop.xlane.xlu0 %267
        %v269 = vadd.f32 %v229, %v230
        %270 = vadd.xlane.f32.xlu0 %v269
        %v271 = vpop.xlane.xlu0 %270
        %v272 = vadd.f32 %v231, %v232
        %273 = vadd.xlane.f32.xlu0 %v272
        %v274 = vpop.xlane.xlu0 %273
        %v275 = vadd.f32 %v233, %v234
        %276 = vadd.xlane.f32.xlu0 %v275
        %v277 = vpop.xlane.xlu0 %276
        %v278 = vadd.f32 %v235, %v236
        %279 = vadd.xlane.f32.xlu0 %v278
        %v280 = vpop.xlane.xlu0 %279
        %v281 = vadd.f32 %v237, %v238
        %282 = vadd.xlane.f32.xlu0 %v281
        %v283 = vpop.xlane.xlu0 %282
        %v284 = vadd.f32 %v239, %v240
        %285 = vadd.xlane.f32.xlu0 %v284
        %v286 = vpop.xlane.xlu0 %285
        %v287 = vadd.f32 %v241, %v242
        %288 = vadd.xlane.f32.xlu0 %v287
        %v289 = vpop.xlane.xlu0 %288
        %v290 = vadd.f32 %v243, %v244
        %291 = vadd.xlane.f32.xlu0 %v290
        %v292 = vpop.xlane.xlu0 %291
        %v293 = vadd.f32 %v245, %v246
        %294 = vadd.xlane.f32.xlu0 %v293
        %v295 = vpop.xlane.xlu0 %294
        %v312 = vlaneseq
        %v313 = vand.u32 %v312, 127
        %v314 = vlaneseq
        %v315 = vshrl.u32 %v314, 7
        %v316 = vsub.s32 %v313, %v315
        %v317 = vrot.slane %v250, %v316
        %v318 = vadd.s32 %v313, 4294967288
        %v319 = vlaneseq
        %v320 = vshrl.u32 %v319, 7
        %v321 = vsub.s32 %v318, %v320
        %v322 = vrot.slane %v253, %v321
        %vm323 = vcmask 130112
        %v324 = vsel %vm323, %v322, %v317
        %v325 = vadd.s32 %v313, 4294967280
        %v326 = vlaneseq
        %v327 = vshrl.u32 %v326, 7
        %v328 = vsub.s32 %v325, %v327
        %v329 = vrot.slane %v256, %v328
        %vm330 = vcmask 195712
        %v331 = vsel %vm330, %v329, %v324
        %v332 = vadd.s32 %v313, 4294967272
        %v333 = vlaneseq
        %v334 = vshrl.u32 %v333, 7
        %v335 = vsub.s32 %v332, %v334
        %v336 = vrot.slane %v259, %v335
        %vm337 = vcmask 261312
        %v338 = vsel %vm337, %v336, %v331
        %v339 = vadd.s32 %v313, 4294967264
        %v340 = vlaneseq
        %v341 = vshrl.u32 %v340, 7
        %v342 = vsub.s32 %v339, %v341
        %v343 = vrot.slane %v262, %v342
        %vm344 = vcmask 326912
        %v345 = vsel %vm344, %v343, %v338
        %v346 = vadd.s32 %v313, 4294967256
        %v347 = vlaneseq
        %v348 = vshrl.u32 %v347, 7
        %v349 = vsub.s32 %v346, %v348
        %v350 = vrot.slane %v265, %v349
        %vm351 = vcmask 392512
        %v352 = vsel %vm351, %v350, %v345
        %v353 = vadd.s32 %v313, 4294967248
        %v354 = vlaneseq
        %v355 = vshrl.u32 %v354, 7
        %v356 = vsub.s32 %v353, %v355
        %v357 = vrot.slane %v268, %v356
        %vm358 = vcmask 458112
        %v359 = vsel %vm358, %v357, %v352
        %v360 = vadd.s32 %v313, 4294967240
        %v361 = vlaneseq
        %v362 = vshrl.u32 %v361, 7
        %v363 = vsub.s32 %v360, %v362
        %v364 = vrot.slane %v271, %v363
        %vm365 = vcmask 523712
        %v366 = vsel %vm365, %v364, %v359
        %v367 = vlaneseq
        %v368 = vshrl.u32 %v367, 7
        %v369 = vsub.s32 %v313, %v368
        %v370 = vrot.slane %v274, %v369
        %v371 = vlaneseq
        %v372 = vshrl.u32 %v371, 7
        %v373 = vsub.s32 %v318, %v372
        %v374 = vrot.slane %v277, %v373
        %v375 = vsel %vm323, %v374, %v370
        %v376 = vlaneseq
        %v377 = vshrl.u32 %v376, 7
        %v378 = vsub.s32 %v325, %v377
        %v379 = vrot.slane %v280, %v378
        %v380 = vsel %vm330, %v379, %v375
        %v381 = vlaneseq
        %v382 = vshrl.u32 %v381, 7
        %v383 = vsub.s32 %v332, %v382
        %v384 = vrot.slane %v283, %v383
        %v385 = vsel %vm337, %v384, %v380
        %v386 = vlaneseq
        %v387 = vshrl.u32 %v386, 7
        %v388 = vsub.s32 %v339, %v387
        %v389 = vrot.slane %v286, %v388
        %v390 = vsel %vm344, %v389, %v385
        %v391 = vlaneseq
        %v392 = vshrl.u32 %v391, 7
        %v393 = vsub.s32 %v346, %v392
        %v394 = vrot.slane %v289, %v393
        %v395 = vsel %vm351, %v394, %v390
        %v396 = vlaneseq
        %v397 = vshrl.u32 %v396, 7
        %v398 = vsub.s32 %v353, %v397
        %v399 = vrot.slane %v292, %v398
        %v400 = vsel %vm358, %v399, %v395
        %v401 = vlaneseq
        %v402 = vshrl.u32 %v401, 7
        %v403 = vsub.s32 %v360, %v402
        %v404 = vrot.slane %v295, %v403
        %v405 = vsel %vm365, %v404, %v400
        %vm406 = vcmask 1041409
        %v407 = vsel %vm406, %v405, %v366
        %v409 = vadd.f32 %v247, %v407
        %vm410 = vcmask 517120
        %411 = vst.msk [vmem:[#allocation2] sm:$0x3] %vm410, %v409
        %v412 = vld [vmem:[#allocation3] sm:$0x3]
        %v413 = vmax.f32 %v215, %v216
        %414 = vmax.xlane.f32.xlu0 %v413
        %v415 = vpop.xlane.xlu0 %414
        %v416 = vmax.f32 %v217, %v218
        %417 = vmax.xlane.f32.xlu0 %v416
        %v418 = vpop.xlane.xlu0 %417
        %v419 = vmax.f32 %v219, %v220
        %420 = vmax.xlane.f32.xlu0 %v419
        %v421 = vpop.xlane.xlu0 %420
        %v422 = vmax.f32 %v221, %v222
        %423 = vmax.xlane.f32.xlu0 %v422
        %v424 = vpop.xlane.xlu0 %423
        %v425 = vmax.f32 %v223, %v224
        %426 = vmax.xlane.f32.xlu0 %v425
        %v427 = vpop.xlane.xlu0 %426
        %v428 = vmax.f32 %v225, %v226
        %429 = vmax.xlane.f32.xlu0 %v428
        %v430 = vpop.xlane.xlu0 %429
        %v431 = vmax.f32 %v227, %v228
        %432 = vmax.xlane.f32.xlu0 %v431
        %v433 = vpop.xlane.xlu0 %432
        %v434 = vmax.f32 %v229, %v230
        %435 = vmax.xlane.f32.xlu0 %v434
        %v436 = vpop.xlane.xlu0 %435
        %v437 = vmax.f32 %v231, %v232
        %438 = vmax.xlane.f32.xlu0 %v437
        %v439 = vpop.xlane.xlu0 %438
        %v440 = vmax.f32 %v233, %v234
        %441 = vmax.xlane.f32.xlu0 %v440
        %v442 = vpop.xlane.xlu0 %441
        %v443 = vmax.f32 %v235, %v236
        %444 = vmax.xlane.f32.xlu0 %v443
        %v445 = vpop.xlane.xlu0 %444
        %v446 = vmax.f32 %v237, %v238
        %447 = vmax.xlane.f32.xlu0 %v446
        %v448 = vpop.xlane.xlu0 %447
        %v449 = vmax.f32 %v239, %v240
        %450 = vmax.xlane.f32.xlu0 %v449
        %v451 = vpop.xlane.xlu0 %450
        %v452 = vmax.f32 %v241, %v242
        %453 = vmax.xlane.f32.xlu0 %v452
        %v454 = vpop.xlane.xlu0 %453
        %v455 = vmax.f32 %v243, %v244
        %456 = vmax.xlane.f32.xlu0 %v455
        %v457 = vpop.xlane.xlu0 %456
        %v458 = vmax.f32 %v245, %v246
        %459 = vmax.xlane.f32.xlu0 %v458
        %v460 = vpop.xlane.xlu0 %459
        %v477 = vlaneseq
        %v478 = vshrl.u32 %v477, 7
        %v479 = vsub.s32 %v313, %v478
        %v480 = vrot.slane %v415, %v479
        %v481 = vlaneseq
        %v482 = vshrl.u32 %v481, 7
        %v483 = vsub.s32 %v318, %v482
        %v484 = vrot.slane %v418, %v483
        %v485 = vsel %vm323, %v484, %v480
        %v486 = vlaneseq
        %v487 = vshrl.u32 %v486, 7
        %v488 = vsub.s32 %v325, %v487
        %v489 = vrot.slane %v421, %v488
        %v490 = vsel %vm330, %v489, %v485
        %v491 = vlaneseq
        %v492 = vshrl.u32 %v491, 7
        %v493 = vsub.s32 %v332, %v492
        %v494 = vrot.slane %v424, %v493
        %v495 = vsel %vm337, %v494, %v490
        %v496 = vlaneseq
        %v497 = vshrl.u32 %v496, 7
        %v498 = vsub.s32 %v339, %v497
        %v499 = vrot.slane %v427, %v498
        %v500 = vsel %vm344, %v499, %v495
        %v501 = vlaneseq
        %v502 = vshrl.u32 %v501, 7
        %v503 = vsub.s32 %v346, %v502
        %v504 = vrot.slane %v430, %v503
        %v505 = vsel %vm351, %v504, %v500
        %v506 = vlaneseq
        %v507 = vshrl.u32 %v506, 7
        %v508 = vsub.s32 %v353, %v507
        %v509 = vrot.slane %v433, %v508
        %v510 = vsel %vm358, %v509, %v505
        %v511 = vlaneseq
        %v512 = vshrl.u32 %v511, 7
        %v513 = vsub.s32 %v360, %v512
        %v514 = vrot.slane %v436, %v513
        %v515 = vsel %vm365, %v514, %v510
        %v516 = vlaneseq
        %v517 = vshrl.u32 %v516, 7
        %v518 = vsub.s32 %v313, %v517
        %v519 = vrot.slane %v439, %v518
        %v520 = vlaneseq
        %v521 = vshrl.u32 %v520, 7
        %v522 = vsub.s32 %v318, %v521
        %v523 = vrot.slane %v442, %v522
        %v524 = vsel %vm323, %v523, %v519
        %v525 = vlaneseq
        %v526 = vshrl.u32 %v525, 7
        %v527 = vsub.s32 %v325, %v526
        %v528 = vrot.slane %v445, %v527
        %v529 = vsel %vm330, %v528, %v524
        %v530 = vlaneseq
        %v531 = vshrl.u32 %v530, 7
        %v532 = vsub.s32 %v332, %v531
        %v533 = vrot.slane %v448, %v532
        %v534 = vsel %vm337, %v533, %v529
        %v535 = vlaneseq
        %v536 = vshrl.u32 %v535, 7
        %v537 = vsub.s32 %v339, %v536
        %v538 = vrot.slane %v451, %v537
        %v539 = vsel %vm344, %v538, %v534
        %v540 = vlaneseq
        %v541 = vshrl.u32 %v540, 7
        %v542 = vsub.s32 %v346, %v541
        %v543 = vrot.slane %v454, %v542
        %v544 = vsel %vm351, %v543, %v539
        %v545 = vlaneseq
        %v546 = vshrl.u32 %v545, 7
        %v547 = vsub.s32 %v353, %v546
        %v548 = vrot.slane %v457, %v547
        %v549 = vsel %vm358, %v548, %v544
        %v550 = vlaneseq
        %v551 = vshrl.u32 %v550, 7
        %v552 = vsub.s32 %v360, %v551
        %v553 = vrot.slane %v460, %v552
        %v554 = vsel %vm365, %v553, %v549
        %v555 = vsel %vm406, %v554, %v515
        %v557 = vmax.f32 %v412, %v555
        %558 = vst.msk [vmem:[#allocation3] sm:$0x3] %vm410, %v557
        // Predicated region
        $region41: #{tpu_custom_call.1} parent=31 // pred_check
          %p559 = pneg %p208
        $region42: #{tpu_custom_call.1} parent=31 // pred_check_branch
          %561 = sbr.rel (%p559) target = $region44
        $region43: #{tpu_custom_call.1} parent=31 // pred_region
          %v562 = vld [vmem:[#allocation2] sm:$0x3]
          %v563 = vmul.f32 %v562, 0.00390625
          %v564 = vld [vmem:[#allocation3] sm:$0x3]
          %v566 = vrot.slane %v564, 6
          %vm568 = vcmask 1041408
          %v569 = vsel %vm568, %v563, %v566
          %v570 = vld [vmem:[%s1] sm:$0xff]
          %v571 = vld [vmem:[%s1 + $0x8] sm:$0xff]
          %v572 = vld [vmem:[%s1 + $0x10] sm:$0xff]
          %v573 = vld [vmem:[%s1 + $0x18] sm:$0xff]
          %v574 = vld [vmem:[%s1 + $0x20] sm:$0xff]
          %v575 = vld [vmem:[%s1 + $0x28] sm:$0xff]
          %v576 = vld [vmem:[%s1 + $0x30] sm:$0xff]
          %v577 = vld [vmem:[%s1 + $0x38] sm:$0xff]
          %vm578 = vcmask 523264
          %v580 = vsel %vm578, %v569, 0
          %582 = vmatprep.subr.mxu0 0.0
          %583 = vmatpush1.msra.mxu0 %v570
          %584 = vmatprep.subr.mxu0 0.0
          %585 = vmatpush1.msra.mxu0 %v571
          %586 = vmatprep.subr.mxu0 0.0
          %587 = vmatpush1.msra.mxu0 %v572
          %588 = vmatprep.subr.mxu0 0.0
          %589 = vmatpush1.msra.mxu0 %v573
          %590 = vmatprep.subr.mxu0 0.0
          %591 = vmatpush1.msra.mxu0 %v574
          %592 = vmatprep.subr.mxu0 0.0
          %593 = vmatpush1.msra.mxu0 %v575
          %594 = vmatprep.subr.mxu0 0.0
          %595 = vmatpush1.msra.mxu0 %v576
          %596 = vmatprep.subr.mxu0 0.0
          %597 = vmatpush1.msra.mxu0 %v577
          %598 = vmatprep.subr.mxu0 0.0
          %599 = vmatpush1.msra.mxu0 0.0
          %600 = vmatprep.subr.mxu0 0.0
          %601 = vmatpush1.msra.mxu0 0.0
          %602 = vmatprep.subr.mxu0 0.0
          %603 = vmatpush1.msra.mxu0 0.0
          %604 = vmatprep.subr.mxu0 0.0
          %605 = vmatpush1.msra.mxu0 0.0
          %606 = vmatprep.subr.mxu0 0.0
          %607 = vmatpush1.msra.mxu0 0.0
          %608 = vmatprep.subr.mxu0 0.0
          %609 = vmatpush1.msra.mxu0 0.0
          %610 = vmatprep.subr.mxu0 0.0
          %611 = vmatpush1.msra.mxu0 0.0
          %612 = vmatprep.subr.mxu0 0.0
          %613 = vmatpush1.msra.mxu0 0.0
          %614 = vmatprep.subr.mxu0 0.0
          %615 = vmatpush1.msra.mxu0 0.0
          %616 = vmatprep.subr.mxu0 0.0
          %617 = vmatpush1.msra.mxu0 0.0
          %618 = vmatprep.subr.mxu0 0.0
          %619 = vmatpush1.msra.mxu0 0.0
          %620 = vmatprep.subr.mxu0 0.0
          %621 = vmatpush1.msra.mxu0 0.0
          %622 = vmatprep.subr.mxu0 0.0
          %623 = vmatpush1.msra.mxu0 0.0
          %624 = vmatprep.subr.mxu0 0.0
          %625 = vmatpush1.msra.mxu0 0.0
          %626 = vmatprep.subr.mxu0 0.0
          %627 = vmatpush1.msra.mxu0 0.0
          %628 = vmatprep.subr.mxu0 0.0
          %629 = vmatpush1.msra.mxu0 0.0
          %630 = vmatprep.subr.mxu0 0.0
          %631 = vmatpush1.msra.mxu0 0.0
          %632 = vmatprep.subr.mxu0 0.0
          %633 = vmatpush1.msra.mxu0 0.0
          %634 = vmatprep.subr.mxu0 0.0
          %635 = vmatpush1.msra.mxu0 0.0
          %636 = vmatprep.subr.mxu0 0.0
          %637 = vmatpush1.msra.mxu0 0.0
          %638 = vmatprep.subr.mxu0 0.0
          %639 = vmatpush1.msra.mxu0 0.0
          %640 = vmatprep.subr.mxu0 0.0
          %641 = vmatpush1.msra.mxu0 0.0
          %642 = vmatprep.subr.mxu0 0.0
          %643 = vmatpush1.msra.mxu0 0.0
          %644 = vmatprep.subr.mxu0 0.0
          %645 = vmatpush1.msra.mxu0 0.0
          %646 = vmatprep.mubr.f32.mxu0 0.0
          %647 = vmatmul.mubr.f32.gmra.mrb[0].mxu0 %v580
          %v648 = vpop.f32.mrb[0].mxu0
          %v649 = vadd.f32 0.0, %v648
          %v650 = vpop.f32.mrb[0].mxu0
          %651 = vdwg.mxu0
          %vm652 = vcmp.gt.f32.partialorder %v649, 0.0
          %v653 = vmul.f32 %v649, 0.01
          %v654 = vsel %vm652, %v649, %v653
          %v655 = vld [vmem:[%s2] sm:$0xf]
          %vm656 = vcmask 31744
          %v658 = vsel %vm656, %v654, 0
          %vm660 = vcmask 1043456
          %v662 = vsel %vm660, %v655, 0
          %664 = vmatprep.subr.mxu0 0.0
          %665 = vmatpush1.msra.mxu0 %v662
          %666 = vmatprep.subr.mxu0 0.0
          %667 = vmatpush1.msra.mxu0 0.0
          %668 = vmatprep.subr.mxu0 0.0
          %669 = vmatpush1.msra.mxu0 0.0
          %670 = vmatprep.subr.mxu0 0.0
          %671 = vmatpush1.msra.mxu0 0.0
          %672 = vmatprep.subr.mxu0 0.0
          %673 = vmatpush1.msra.mxu0 0.0
          %674 = vmatprep.subr.mxu0 0.0
          %675 = vmatpush1.msra.mxu0 0.0
          %676 = vmatprep.subr.mxu0 0.0
          %677 = vmatpush1.msra.mxu0 0.0
          %678 = vmatprep.subr.mxu0 0.0
          %679 = vmatpush1.msra.mxu0 0.0
          %680 = vmatprep.subr.mxu0 0.0
          %681 = vmatpush1.msra.mxu0 0.0
          %682 = vmatprep.subr.mxu0 0.0
          %683 = vmatpush1.msra.mxu0 0.0
          %684 = vmatprep.subr.mxu0 0.0
          %685 = vmatpush1.msra.mxu0 0.0
          %686 = vmatprep.subr.mxu0 0.0
          %687 = vmatpush1.msra.mxu0 0.0
          %688 = vmatprep.subr.mxu0 0.0
          %689 = vmatpush1.msra.mxu0 0.0
          %690 = vmatprep.subr.mxu0 0.0
          %691 = vmatpush1.msra.mxu0 0.0
          %692 = vmatprep.subr.mxu0 0.0
          %693 = vmatpush1.msra.mxu0 0.0
          %694 = vmatprep.subr.mxu0 0.0
          %695 = vmatpush1.msra.mxu0 0.0
          %696 = vmatprep.subr.mxu0 0.0
          %697 = vmatpush1.msra.mxu0 0.0
          %698 = vmatprep.subr.mxu0 0.0
          %699 = vmatpush1.msra.mxu0 0.0
          %700 = vmatprep.subr.mxu0 0.0
          %701 = vmatpush1.msra.mxu0 0.0
          %702 = vmatprep.subr.mxu0 0.0
          %703 = vmatpush1.msra.mxu0 0.0
          %704 = vmatprep.subr.mxu0 0.0
          %705 = vmatpush1.msra.mxu0 0.0
          %706 = vmatprep.subr.mxu0 0.0
          %707 = vmatpush1.msra.mxu0 0.0
          %708 = vmatprep.subr.mxu0 0.0
          %709 = vmatpush1.msra.mxu0 0.0
          %710 = vmatprep.subr.mxu0 0.0
          %711 = vmatpush1.msra.mxu0 0.0
          %712 = vmatprep.subr.mxu0 0.0
          %713 = vmatpush1.msra.mxu0 0.0
          %714 = vmatprep.subr.mxu0 0.0
          %715 = vmatpush1.msra.mxu0 0.0
          %716 = vmatprep.subr.mxu0 0.0
          %717 = vmatpush1.msra.mxu0 0.0
          %718 = vmatprep.subr.mxu0 0.0
          %719 = vmatpush1.msra.mxu0 0.0
          %720 = vmatprep.subr.mxu0 0.0
          %721 = vmatpush1.msra.mxu0 0.0
          %722 = vmatprep.subr.mxu0 0.0
          %723 = vmatpush1.msra.mxu0 0.0
          %724 = vmatprep.subr.mxu0 0.0
          %725 = vmatpush1.msra.mxu0 0.0
          %726 = vmatprep.subr.mxu0 0.0
          %727 = vmatpush1.msra.mxu0 0.0
          %728 = vmatprep.mubr.f32.mxu0 0.0
          %729 = vmatmul.mubr.f32.gmra.mrb[0].mxu0 %v658
          %v730 = vpop.f32.mrb[0].mxu0
          %v731 = vadd.f32 0.0, %v730
          %v732 = vpop.f32.mrb[0].mxu0
          %733 = vdwg.mxu0
          %v735 = vrot.slane %v731, 2
          %v737 = vadd.f32 %v731, %v735
          %v738 = vxor.u32 %v737, 2147483648
          %v739 = vmul.f32 %v738, 1.442695
          %v740 = vpow.pop %v739
          %v741 = vadd.f32 %v740, 1.0
          %v742 = vrcp.pop %v741
          %v743 = vmul.f32 1.0, %v742
          %744 = vst.msk [vmem:[%s205] sm:$0x3] %vm410, %v743
        $region44: #{tpu_custom_call.1} parent=31 // pred_fallthru
          _
        %s745 = sand.u32 %s110, 1
        %s746 = scalar_lea.sflag [#allocation6], %s745
        %s747 = sand.u32 %s110, 1
        %s748 = smul.addr %s747, 2
        %s749 = scalar_lea.vmem [#allocation7], %s748
        // Predicated region
        $region45: #{tpu_custom_call.1} parent=31 // pred_check
          %p750 = pneg %p120
        $region46: #{tpu_custom_call.1} parent=31 // pred_check_branch
          %752 = sbr.rel (%p750) target = $region48
        $region47: #{tpu_custom_call.1} parent=31 // pred_region
          %s754 = ssub.s32 32, 32
          %755 = vsyncadd %s746, %s754
          %s756 = smul.addr %s24, 32
          %s757 = scalar_lea.hbm %s3, %s756
          %s759 = sshll.u32 %s749, 4
          %s760 = int_to_ptr.vmem [resolvable:$true] %s759
          %762 = dma.vmem_to_hbm [thread:$0]  %s760, 32, %s757, %s746
        $region48: #{tpu_custom_call.1} parent=31 // pred_fallthru
          _
      $region32: #{tpu_custom_call.1} parent=5 // pred_fallthru
        _
      %p763 = scmp.le.s32.totalorder 2, %s15
      // Predicated region
      $region49: #{tpu_custom_call.1} parent=5 // pred_check
        %p764 = pneg %p763
      $region50: #{tpu_custom_call.1} parent=5 // pred_check_branch
        %766 = sbr.rel (%p764) target = $region52
      $region51: #{tpu_custom_call.1} parent=5 // pred_region
        %s767 = ssub.s32 %s15, 2
        // Predicated region
        $region53: #{tpu_custom_call.1} parent=51 // pred_check
          %p768 = pneg %p126
        $region54: #{tpu_custom_call.1} parent=51 // pred_check_branch
          %770 = sbr.rel (%p768) target = $region56
        $region55: #{tpu_custom_call.1} parent=51 // pred_region
          %s771 = sand.u32 %s111, 1
          %s772 = scalar_lea.sflag [#allocation6], %s771
          %s773 = sand.u32 %s111, 1
          %s774 = smul.addr %s773, 2
          %s775 = scalar_lea.vmem [#allocation7], %s774
          %776 = dma.done %s772, 32
        $region56: #{tpu_custom_call.1} parent=51 // pred_fallthru
          _
      $region52: #{tpu_custom_call.1} parent=5 // pred_fallthru
        _
    $region6: #{tpu_custom_call.1} parent=1 // loop_footer
      %s19 = sadd.s32 1, %s15
    $region7: #{tpu_custom_call.1} parent=1 // loop_footer_branch
      %14 = sbr.rel target = $region3
    $region8: #{tpu_custom_call.1} parent=1 // loop_exit
      _
    %777 = vsyncpa [#allocation5], 1
    %s778 = scalar_lea.sflag [#allocation5], 1
    %779 = vsyncpa %s778, 1
    %780 = vsyncpa [#allocation6], 1
    %s781 = scalar_lea.sflag [#allocation6], 1
    %782 = vsyncpa %s781, 1

</llo_original>
